<compile_context>
chip_gen: v7x
topology: tpu7x:2x2x1
jax: 0.10.0
libtpu: 0.0.40
codegen_flags: <defaults>
</compile_context>

<pallas_src>
import jax
import jax.numpy as jnp
from jax.experimental import pallas as pl
from jax.experimental.pallas import tpu as pltpu


def _bilinear_resize_matrix(out_size: int, in_size: int) -> jnp.ndarray:
    """Row-stochastic [out_size, in_size] bilinear interpolation matrix
    (half-pixel / align_corners=False convention, edges clamped)."""
    i = jnp.arange(out_size, dtype=jnp.float32)
    src = (i + 0.5) * (in_size / out_size) - 0.5
    i0 = jnp.floor(src)
    frac = src - i0
    i0c = jnp.clip(i0.astype(jnp.int32), 0, in_size - 1)
    i1c = jnp.clip(i0.astype(jnp.int32) + 1, 0, in_size - 1)
    w = (jax.nn.one_hot(i0c, in_size, dtype=jnp.float32) * (1.0 - frac)[:, None]
         + jax.nn.one_hot(i1c, in_size, dtype=jnp.float32) * frac[:, None])
    return w


def _mnist_transform_kernel(x_ref, m_ref, o_ref):
    # x_ref: (TB, H_in*W_in) int8 (uint8 bit pattern) or float32
    # m_ref: (H_in*W_in, TN) float32 fused resize+normalize matrix
    # o_ref: (TB, TN)       float32
    x = x_ref[...]
    if x.dtype == jnp.int8:
        # Recover the original uint8 value 0..255 from its int8 bit pattern,
        # widening BEFORE the matmul so the MXU only sees f32 operands.
        xf = (x.astype(jnp.int32) & 0xFF).astype(jnp.float32)
    else:
        xf = x.astype(jnp.float32)
    o_ref[...] = (
        jnp.dot(xf, m_ref[...], preferred_element_type=jnp.float32) - 1.0
    )


def mnist_transform(x: jnp.ndarray, size: int = 32,
                    block_images: int = 256, block_out: int = 2048) -> jnp.ndarray:
    """x: (N, C, H_in, W_in) uint8 pixels (or float32 pixel values in [0, 255]).
    Returns (N, C, size, size) float32 normalized images."""
    n, c, h_in, w_in = x.shape
    h_out = w_out = size
    k = h_in * w_in
    p = h_out * w_out
    nc = n * c

    # Fused resize + ToTensor + Normalize matrix, built once at trace time:
    # (x/255 - 0.7)/0.7 == x @ (kron(Wy, Wx).T / (255*0.7)) - 1
    wy = _bilinear_resize_matrix(h_out, h_in)            # (H_out, H_in)
    wx = _bilinear_resize_matrix(w_out, w_in)            # (W_out, W_in)
    m = (jnp.kron(wy, wx).T * (1.0 / (255.0 * 0.7))).astype(jnp.float32)  # (K, P)

    # Lane-dense 2-D views: free, layout-identity reshapes.
    x_flat = x.reshape(nc, k)
    if x_flat.dtype == jnp.uint8:
        # Keep 1 byte/pixel in HBM; reinterpret bits as int8 (widened in-kernel).
        x_flat = jax.lax.bitcast_convert_type(x_flat, jnp.int8)
    elif x_flat.dtype != jnp.float32:
        x_flat = x_flat.astype(jnp.float32)

    # Batch tile: many images per grid step.
    tb = min(block_images, nc)
    nc_pad = pl.cdiv(nc, tb) * tb
    if nc_pad != nc:
        x_flat = jnp.pad(x_flat, ((0, nc_pad - nc), (0, 0)))

    # Output-column tile so the fused matrix block stays a few MiB of VMEM.
    tn = p if (p <= block_out or p % block_out != 0) else block_out

    grid = (nc_pad // tb, p // tn)

    out_flat = pl.pallas_call(
        _mnist_transform_kernel,
        out_shape=jax.ShapeDtypeStruct((nc_pad, p), jnp.float32),
        grid_spec=pltpu.PrefetchScalarGridSpec(
            num_scalar_prefetch=0,
            grid=grid,
            in_specs=[
                pl.BlockSpec((tb, k), lambda i, j: (i, 0)),   # image block
                pl.BlockSpec((k, tn), lambda i, j: (0, j)),   # fused matrix cols
            ],
            out_specs=pl.BlockSpec((tb, tn), lambda i, j: (i, j)),
        ),
        compiler_params=pltpu.CompilerParams(
            dimension_semantics=("parallel", "parallel"),
            vmem_limit_bytes=48 * 1024 * 1024,
        ),
    )(x_flat, m)

    # Free reshape: (NC, H_out*W_out) row-major == (N, C, H_out, W_out) row-major.
    return out_flat[:nc].reshape(n, c, h_out, w_out)


def _reference(x: jnp.ndarray, size: int) -> jnp.ndarray:
    n, c, h_in, w_in = x.shape
    xf = x.astype(jnp.float32)
    wy = _bilinear_resize_matrix(size, h_in)
    wx = _bilinear_resize_matrix(size, w_in)
    resized = jnp.einsum("oh,nchw,pw->ncop", wy, xf, wx,
                         precision=jax.lax.Precision.HIGHEST)
    return (resized / 255.0 - 0.7) / 0.7


if __name__ == "__main__":
    key = jax.random.PRNGKey(0)
    # MNIST-like grayscale uint8 inputs: batch=2, channels=1, 16x16, resized to 32.
    x = jax.random.randint(key, (2, 1, 16, 16), 0, 256,
                           dtype=jnp.int32).astype(jnp.uint8)

    out = mnist_transform(x, size=32)
    out = jax.block_until_ready(out)

    ref = _reference(x, 32)
    assert out.shape == (2, 1, 32, 32)
    assert jnp.allclose(out, ref, atol=1e-4, rtol=1e-4), \
        float(jnp.max(jnp.abs(out - ref)))
    print("KERNEL_OK")
</pallas_src>

<mosaic_0001>
module attributes {stable_mosaic.version = 11 : i64} {
  func.func @_mnist_transform_kernel(%arg0: i32, %arg1: i32, %arg2: memref<2x256xi8, #tpu.memory_space<vmem>>, %arg3: memref<256x1024xf32, #tpu.memory_space<vmem>>, %arg4: memref<2x1024xf32, #tpu.memory_space<vmem>>) attributes {dimension_semantics = [#tpu.dimension_semantics<parallel>, #tpu.dimension_semantics<parallel>], iteration_bounds = array<i64: 1, 1>, scalar_prefetch = 0 : i64, scratch_operands = 0 : i64, tpu.core_type = #tpu.core_type<tc>, window_params = [{transform_indices = @transform_0, window_bounds = array<i64: 2, 256>}, {transform_indices = @transform_1, window_bounds = array<i64: 256, 1024>}, {transform_indices = @transform_2, window_bounds = array<i64: 2, 1024>}]} {
    %c0 = arith.constant 0 : index
    %c0_0 = arith.constant 0 : index
    %0 = vector.load %arg2[%c0, %c0_0] : memref<2x256xi8, #tpu.memory_space<vmem>>, vector<2x256xi8>
    %1 = arith.extsi %0 : vector<2x256xi8> to vector<2x256xi32>
    %c255_i32 = arith.constant 255 : i32
    %2 = vector.broadcast %c255_i32 : i32 to vector<2x256xi32>
    %3 = arith.andi %1, %2 : vector<2x256xi32>
    %4 = arith.sitofp %3 : vector<2x256xi32> to vector<2x256xf32>
    %c0_1 = arith.constant 0 : index
    %c0_2 = arith.constant 0 : index
    %5 = vector.load %arg3[%c0_1, %c0_2] : memref<256x1024xf32, #tpu.memory_space<vmem>>, vector<256x1024xf32>
    %cst = arith.constant dense<0.000000e+00> : vector<2x1024xf32>
    %6 = tpu.matmul %4, %5, %cst {dimension_numbers = #tpu.dot_dimension_numbers<[1], [0], [0], [1], [0, 0, 1, 1], [], []>} : vector<2x256xf32>, vector<256x1024xf32>, vector<2x1024xf32> -> vector<2x1024xf32>
    %cst_3 = arith.constant 1.000000e+00 : f32
    %7 = vector.broadcast %cst_3 : f32 to vector<2x1024xf32>
    %8 = arith.subf %6, %7 : vector<2x1024xf32>
    %c0_4 = arith.constant 0 : index
    %c0_5 = arith.constant 0 : index
    %9 = vector.load %arg4[%c0_4, %c0_5] : memref<2x1024xf32, #tpu.memory_space<vmem>>, vector<2x1024xf32>
    tpu.vector_store %arg4[%c0_4, %c0_5], %8 {strides = array<i32>} : memref<2x1024xf32, #tpu.memory_space<vmem>>, vector<2x1024xf32>,
    return
  }
  func.func @transform_0(%arg0: i32, %arg1: i32) -> (i32, i32) {
    %c0_i32 = arith.constant 0 : i32
    %c0_i32_0 = arith.constant 0 : i32
    return %arg0, %c0_i32 : i32, i32
  }
  func.func @transform_1(%arg0: i32, %arg1: i32) -> (i32, i32) {
    %c0_i32 = arith.constant 0 : i32
    %c0_i32_0 = arith.constant 0 : i32
    return %c0_i32, %arg1 : i32, i32
  }
  func.func @transform_2(%arg0: i32, %arg1: i32) -> (i32, i32) {
    %c0_i32 = arith.constant 0 : i32
    return %arg0, %arg1 : i32, i32
  }
}

</mosaic_0001>

<llo_original>
// kernel: tpu_custom_call.1
$region0: #{tpu_custom_call.1}
  #allocation0 [shape = 'u32[]', space=smem, size = 0x4, offset = 0x4, fixed_abs, tag = 'smem constant byte address 0x4 - core index']
  #allocation1 [shape = 'u32[144,128]{1,0:T(1,128)}', space=vmem, size = 0x12000, scoped, tag = 'internal scratch']
  %s0 = inlined_call_operand.hbm [shape: s8[2,256], index: 0, kind: input, shape index: {}]
  %s1 = inlined_call_operand.hbm [shape: f32[256,1024], index: 1, kind: input, shape index: {}]
  %s2 = inlined_call_operand.hbm [shape: f32[2,1024], index: 2, kind: output, shape index: {}]
  %s3 = sld [smem:[#allocation0]]
  $region26: #{tpu_custom_call.1} parent=0
    _
  %s5 = ssub.s32 1, %s3
  %s6 = scalar_select 0, %s5, %s3
  $region1: #{tpu_custom_call.1} parent=0
    #allocation2 [shape = 'u8[1024]{0}', space=vmem, size = 0x400, scoped, tag = 'input window, operand 0, single buffered']
    #allocation3 [shape = 's32[1]{0}', space=sflag, size = 0x4, scoped, tag = 'scoped memory for tpu_custom_call.1']
    #allocation4 [shape = 's32[1]{0}', space=sflag, size = 0x4, scoped, tag = 'scoped memory for tpu_custom_call.1']
    #allocation5 [shape = 'u8[1048576]{0}', space=vmem, size = 0x100000, scoped, tag = 'input window, operand 1, single buffered']
    #allocation6 [shape = 's32[1]{0}', space=sflag, size = 0x4, scoped, tag = 'scoped memory for tpu_custom_call.1']
    #allocation7 [shape = 'u8[8192]{0}', space=vmem, size = 0x2000, scoped, tag = 'output window, operand 0, single buffered']
    %7 = vsyncpa [#allocation3], 0
    %8 = vsyncpa [#allocation6], 0
    %9 = vsyncpa [#allocation4], 0
    // Predicated region
    $region2: #{tpu_custom_call.1} parent=1 // pred_check
      _
    $region3: #{tpu_custom_call.1} parent=1 // pred_check_branch
      %11 = sbr.rel (0) target = $region5
    $region4: #{tpu_custom_call.1} parent=1 // pred_region
      %s13 = ssub.s32 32, 32
      %14 = vsyncadd [#allocation3], %s13
      %s16 = sshll.u32 [#allocation2], 4
      %s17 = int_to_ptr.vmem [resolvable:$true] %s16
      %19 = dma.hbm_to_vmem [thread:$0]  %s0, 32, %s17, [#allocation3]
    $region5: #{tpu_custom_call.1} parent=1 // pred_fallthru
      _
    // Predicated region
    $region6: #{tpu_custom_call.1} parent=1 // pred_check
      _
    $region7: #{tpu_custom_call.1} parent=1 // pred_check_branch
      %21 = sbr.rel (0) target = $region9
    $region8: #{tpu_custom_call.1} parent=1 // pred_region
      %s23 = ssub.s32 32768, 32768
      %24 = vsyncadd [#allocation6], %s23
      %s25 = sshll.u32 [#allocation5], 4
      %s26 = int_to_ptr.vmem [resolvable:$true] %s25
      %31 = dma.hbm_to_vmem [thread:$0]  %s1, 32768, %s26, [#allocation6], 1024, 1024, 64
    $region9: #{tpu_custom_call.1} parent=1 // pred_fallthru
      _
    // Predicated region
    $region10: #{tpu_custom_call.1} parent=1 // pred_check
      _
    $region11: #{tpu_custom_call.1} parent=1 // pred_check_branch
      %33 = sbr.rel (0) target = $region13
    $region12: #{tpu_custom_call.1} parent=1 // pred_region
      %34 = dma.done [#allocation3], 32
    $region13: #{tpu_custom_call.1} parent=1 // pred_fallthru
      _
    // Predicated region
    $region14: #{tpu_custom_call.1} parent=1 // pred_check
      _
    $region15: #{tpu_custom_call.1} parent=1 // pred_check_branch
      %36 = sbr.rel (0) target = $region17
    $region16: #{tpu_custom_call.1} parent=1 // pred_region
      %37 = dma.done [#allocation6], 32768
    $region17: #{tpu_custom_call.1} parent=1 // pred_fallthru
      _
    %v38 = vld [vmem:[#allocation2] sm:$0x3]
    %v39 = vunpack.c.0.s8 %v38
    %v40 = vand.u32 %v39, 255
    %v41 = vcvt.s32.f32 %v40
    %v42 = vld [vmem:[#allocation5] sm:$0xff]
    %v43 = vld [vmem:[#allocation5 + $0x8] sm:$0xff]
    %v44 = vld [vmem:[#allocation5 + $0x10] sm:$0xff]
    %v45 = vld [vmem:[#allocation5 + $0x18] sm:$0xff]
    %v46 = vld [vmem:[#allocation5 + $0x20] sm:$0xff]
    %v47 = vld [vmem:[#allocation5 + $0x28] sm:$0xff]
    %v48 = vld [vmem:[#allocation5 + $0x30] sm:$0xff]
    %v49 = vld [vmem:[#allocation5 + $0x38] sm:$0xff]
    %v50 = vld [vmem:[#allocation5 + $0x40] sm:$0xff]
    %v51 = vld [vmem:[#allocation5 + $0x48] sm:$0xff]
    %v52 = vld [vmem:[#allocation5 + $0x50] sm:$0xff]
    %v53 = vld [vmem:[#allocation5 + $0x58] sm:$0xff]
    %v54 = vld [vmem:[#allocation5 + $0x60] sm:$0xff]
    %v55 = vld [vmem:[#allocation5 + $0x68] sm:$0xff]
    %v56 = vld [vmem:[#allocation5 + $0x70] sm:$0xff]
    %v57 = vld [vmem:[#allocation5 + $0x78] sm:$0xff]
    %v58 = vld [vmem:[#allocation5 + $0x80] sm:$0xff]
    %v59 = vld [vmem:[#allocation5 + $0x88] sm:$0xff]
    %v60 = vld [vmem:[#allocation5 + $0x90] sm:$0xff]
    %v61 = vld [vmem:[#allocation5 + $0x98] sm:$0xff]
    %v62 = vld [vmem:[#allocation5 + $0xa0] sm:$0xff]
    %v63 = vld [vmem:[#allocation5 + $0xa8] sm:$0xff]
    %v64 = vld [vmem:[#allocation5 + $0xb0] sm:$0xff]
    %v65 = vld [vmem:[#allocation5 + $0xb8] sm:$0xff]
    %v66 = vld [vmem:[#allocation5 + $0xc0] sm:$0xff]
    %v67 = vld [vmem:[#allocation5 + $0xc8] sm:$0xff]
    %v68 = vld [vmem:[#allocation5 + $0xd0] sm:$0xff]
    %v69 = vld [vmem:[#allocation5 + $0xd8] sm:$0xff]
    %v70 = vld [vmem:[#allocation5 + $0xe0] sm:$0xff]
    %v71 = vld [vmem:[#allocation5 + $0xe8] sm:$0xff]
    %v72 = vld [vmem:[#allocation5 + $0xf0] sm:$0xff]
    %v73 = vld [vmem:[#allocation5 + $0xf8] sm:$0xff]
    %v74 = vld [vmem:[#allocation5 + $0x100] sm:$0xff]
    %v75 = vld [vmem:[#allocation5 + $0x108] sm:$0xff]
    %v76 = vld [vmem:[#allocation5 + $0x110] sm:$0xff]
    %v77 = vld [vmem:[#allocation5 + $0x118] sm:$0xff]
    %v78 = vld [vmem:[#allocation5 + $0x120] sm:$0xff]
    %v79 = vld [vmem:[#allocation5 + $0x128] sm:$0xff]
    %v80 = vld [vmem:[#allocation5 + $0x130] sm:$0xff]
    %v81 = vld [vmem:[#allocation5 + $0x138] sm:$0xff]
    %v82 = vld [vmem:[#allocation5 + $0x140] sm:$0xff]
    %v83 = vld [vmem:[#allocation5 + $0x148] sm:$0xff]
    %v84 = vld [vmem:[#allocation5 + $0x150] sm:$0xff]
    %v85 = vld [vmem:[#allocation5 + $0x158] sm:$0xff]
    %v86 = vld [vmem:[#allocation5 + $0x160] sm:$0xff]
    %v87 = vld [vmem:[#allocation5 + $0x168] sm:$0xff]
    %v88 = vld [vmem:[#allocation5 + $0x170] sm:$0xff]
    %v89 = vld [vmem:[#allocation5 + $0x178] sm:$0xff]
    %v90 = vld [vmem:[#allocation5 + $0x180] sm:$0xff]
    %v91 = vld [vmem:[#allocation5 + $0x188] sm:$0xff]
    %v92 = vld [vmem:[#allocation5 + $0x190] sm:$0xff]
    %v93 = vld [vmem:[#allocation5 + $0x198] sm:$0xff]
    %v94 = vld [vmem:[#allocation5 + $0x1a0] sm:$0xff]
    %v95 = vld [vmem:[#allocation5 + $0x1a8] sm:$0xff]
    %v96 = vld [vmem:[#allocation5 + $0x1b0] sm:$0xff]
    %v97 = vld [vmem:[#allocation5 + $0x1b8] sm:$0xff]
    %v98 = vld [vmem:[#allocation5 + $0x1c0] sm:$0xff]
    %v99 = vld [vmem:[#allocation5 + $0x1c8] sm:$0xff]
    %v100 = vld [vmem:[#allocation5 + $0x1d0] sm:$0xff]
    %v101 = vld [vmem:[#allocation5 + $0x1d8] sm:$0xff]
    %v102 = vld [vmem:[#allocation5 + $0x1e0] sm:$0xff]
    %v103 = vld [vmem:[#allocation5 + $0x1e8] sm:$0xff]
    %v104 = vld [vmem:[#allocation5 + $0x1f0] sm:$0xff]
    %v105 = vld [vmem:[#allocation5 + $0x1f8] sm:$0xff]
    %v106 = vld [vmem:[#allocation5 + $0x200] sm:$0xff]
    %v107 = vld [vmem:[#allocation5 + $0x208] sm:$0xff]
    %v108 = vld [vmem:[#allocation5 + $0x210] sm:$0xff]
    %v109 = vld [vmem:[#allocation5 + $0x218] sm:$0xff]
    %v110 = vld [vmem:[#allocation5 + $0x220] sm:$0xff]
    %v111 = vld [vmem:[#allocation5 + $0x228] sm:$0xff]
    %v112 = vld [vmem:[#allocation5 + $0x230] sm:$0xff]
    %v113 = vld [vmem:[#allocation5 + $0x238] sm:$0xff]
    %v114 = vld [vmem:[#allocation5 + $0x240] sm:$0xff]
    %v115 = vld [vmem:[#allocation5 + $0x248] sm:$0xff]
    %v116 = vld [vmem:[#allocation5 + $0x250] sm:$0xff]
    %v117 = vld [vmem:[#allocation5 + $0x258] sm:$0xff]
    %v118 = vld [vmem:[#allocation5 + $0x260] sm:$0xff]
    %v119 = vld [vmem:[#allocation5 + $0x268] sm:$0xff]
    %v120 = vld [vmem:[#allocation5 + $0x270] sm:$0xff]
    %v121 = vld [vmem:[#allocation5 + $0x278] sm:$0xff]
    %v122 = vld [vmem:[#allocation5 + $0x280] sm:$0xff]
    %v123 = vld [vmem:[#allocation5 + $0x288] sm:$0xff]
    %v124 = vld [vmem:[#allocation5 + $0x290] sm:$0xff]
    %v125 = vld [vmem:[#allocation5 + $0x298] sm:$0xff]
    %v126 = vld [vmem:[#allocation5 + $0x2a0] sm:$0xff]
    %v127 = vld [vmem:[#allocation5 + $0x2a8] sm:$0xff]
    %v128 = vld [vmem:[#allocation5 + $0x2b0] sm:$0xff]
    %v129 = vld [vmem:[#allocation5 + $0x2b8] sm:$0xff]
    %v130 = vld [vmem:[#allocation5 + $0x2c0] sm:$0xff]
    %v131 = vld [vmem:[#allocation5 + $0x2c8] sm:$0xff]
    %v132 = vld [vmem:[#allocation5 + $0x2d0] sm:$0xff]
    %v133 = vld [vmem:[#allocation5 + $0x2d8] sm:$0xff]
    %v134 = vld [vmem:[#allocation5 + $0x2e0] sm:$0xff]
    %v135 = vld [vmem:[#allocation5 + $0x2e8] sm:$0xff]
    %v136 = vld [vmem:[#allocation5 + $0x2f0] sm:$0xff]
    %v137 = vld [vmem:[#allocation5 + $0x2f8] sm:$0xff]
    %v138 = vld [vmem:[#allocation5 + $0x300] sm:$0xff]
    %v139 = vld [vmem:[#allocation5 + $0x308] sm:$0xff]
    %v140 = vld [vmem:[#allocation5 + $0x310] sm:$0xff]
    %v141 = vld [vmem:[#allocation5 + $0x318] sm:$0xff]
    %v142 = vld [vmem:[#allocation5 + $0x320] sm:$0xff]
    %v143 = vld [vmem:[#allocation5 + $0x328] sm:$0xff]
    %v144 = vld [vmem:[#allocation5 + $0x330] sm:$0xff]
    %v145 = vld [vmem:[#allocation5 + $0x338] sm:$0xff]
    %v146 = vld [vmem:[#allocation5 + $0x340] sm:$0xff]
    %v147 = vld [vmem:[#allocation5 + $0x348] sm:$0xff]
    %v148 = vld [vmem:[#allocation5 + $0x350] sm:$0xff]
    %v149 = vld [vmem:[#allocation5 + $0x358] sm:$0xff]
    %v150 = vld [vmem:[#allocation5 + $0x360] sm:$0xff]
    %v151 = vld [vmem:[#allocation5 + $0x368] sm:$0xff]
    %v152 = vld [vmem:[#allocation5 + $0x370] sm:$0xff]
    %v153 = vld [vmem:[#allocation5 + $0x378] sm:$0xff]
    %v154 = vld [vmem:[#allocation5 + $0x380] sm:$0xff]
    %v155 = vld [vmem:[#allocation5 + $0x388] sm:$0xff]
    %v156 = vld [vmem:[#allocation5 + $0x390] sm:$0xff]
    %v157 = vld [vmem:[#allocation5 + $0x398] sm:$0xff]
    %v158 = vld [vmem:[#allocation5 + $0x3a0] sm:$0xff]
    %v159 = vld [vmem:[#allocation5 + $0x3a8] sm:$0xff]
    %v160 = vld [vmem:[#allocation5 + $0x3b0] sm:$0xff]
    %v161 = vld [vmem:[#allocation5 + $0x3b8] sm:$0xff]
    %v162 = vld [vmem:[#allocation5 + $0x3c0] sm:$0xff]
    %v163 = vld [vmem:[#allocation5 + $0x3c8] sm:$0xff]
    %v164 = vld [vmem:[#allocation5 + $0x3d0] sm:$0xff]
    %v165 = vld [vmem:[#allocation5 + $0x3d8] sm:$0xff]
    %v166 = vld [vmem:[#allocation5 + $0x3e0] sm:$0xff]
    %v167 = vld [vmem:[#allocation5 + $0x3e8] sm:$0xff]
    %v168 = vld [vmem:[#allocation5 + $0x3f0] sm:$0xff]
    %v169 = vld [vmem:[#allocation5 + $0x3f8] sm:$0xff]
    %v170 = vld [vmem:[#allocation5 + $0x400] sm:$0xff]
    %v171 = vld [vmem:[#allocation5 + $0x408] sm:$0xff]
    %v172 = vld [vmem:[#allocation5 + $0x410] sm:$0xff]
    %v173 = vld [vmem:[#allocation5 + $0x418] sm:$0xff]
    %v174 = vld [vmem:[#allocation5 + $0x420] sm:$0xff]
    %v175 = vld [vmem:[#allocation5 + $0x428] sm:$0xff]
    %v176 = vld [vmem:[#allocation5 + $0x430] sm:$0xff]
    %v177 = vld [vmem:[#allocation5 + $0x438] sm:$0xff]
    %v178 = vld [vmem:[#allocation5 + $0x440] sm:$0xff]
    %v179 = vld [vmem:[#allocation5 + $0x448] sm:$0xff]
    %v180 = vld [vmem:[#allocation5 + $0x450] sm:$0xff]
    %v181 = vld [vmem:[#allocation5 + $0x458] sm:$0xff]
    %v182 = vld [vmem:[#allocation5 + $0x460] sm:$0xff]
    %v183 = vld [vmem:[#allocation5 + $0x468] sm:$0xff]
    %v184 = vld [vmem:[#allocation5 + $0x470] sm:$0xff]
    %v185 = vld [vmem:[#allocation5 + $0x478] sm:$0xff]
    %v186 = vld [vmem:[#allocation5 + $0x480] sm:$0xff]
    %v187 = vld [vmem:[#allocation5 + $0x488] sm:$0xff]
    %v188 = vld [vmem:[#allocation5 + $0x490] sm:$0xff]
    %v189 = vld [vmem:[#allocation5 + $0x498] sm:$0xff]
    %v190 = vld [vmem:[#allocation5 + $0x4a0] sm:$0xff]
    %v191 = vld [vmem:[#allocation5 + $0x4a8] sm:$0xff]
    %v192 = vld [vmem:[#allocation5 + $0x4b0] sm:$0xff]
    %v193 = vld [vmem:[#allocation5 + $0x4b8] sm:$0xff]
    %v194 = vld [vmem:[#allocation5 + $0x4c0] sm:$0xff]
    %v195 = vld [vmem:[#allocation5 + $0x4c8] sm:$0xff]
    %v196 = vld [vmem:[#allocation5 + $0x4d0] sm:$0xff]
    %v197 = vld [vmem:[#allocation5 + $0x4d8] sm:$0xff]
    %v198 = vld [vmem:[#allocation5 + $0x4e0] sm:$0xff]
    %v199 = vld [vmem:[#allocation5 + $0x4e8] sm:$0xff]
    %v200 = vld [vmem:[#allocation5 + $0x4f0] sm:$0xff]
    %v201 = vld [vmem:[#allocation5 + $0x4f8] sm:$0xff]
    %v202 = vld [vmem:[#allocation5 + $0x500] sm:$0xff]
    %v203 = vld [vmem:[#allocation5 + $0x508] sm:$0xff]
    %v204 = vld [vmem:[#allocation5 + $0x510] sm:$0xff]
    %v205 = vld [vmem:[#allocation5 + $0x518] sm:$0xff]
    %v206 = vld [vmem:[#allocation5 + $0x520] sm:$0xff]
    %v207 = vld [vmem:[#allocation5 + $0x528] sm:$0xff]
    %v208 = vld [vmem:[#allocation5 + $0x530] sm:$0xff]
    %v209 = vld [vmem:[#allocation5 + $0x538] sm:$0xff]
    %v210 = vld [vmem:[#allocation5 + $0x540] sm:$0xff]
    %v211 = vld [vmem:[#allocation5 + $0x548] sm:$0xff]
    %v212 = vld [vmem:[#allocation5 + $0x550] sm:$0xff]
    %v213 = vld [vmem:[#allocation5 + $0x558] sm:$0xff]
    %v214 = vld [vmem:[#allocation5 + $0x560] sm:$0xff]
    %v215 = vld [vmem:[#allocation5 + $0x568] sm:$0xff]
    %v216 = vld [vmem:[#allocation5 + $0x570] sm:$0xff]
    %v217 = vld [vmem:[#allocation5 + $0x578] sm:$0xff]
    %v218 = vld [vmem:[#allocation5 + $0x580] sm:$0xff]
    %v219 = vld [vmem:[#allocation5 + $0x588] sm:$0xff]
    %v220 = vld [vmem:[#allocation5 + $0x590] sm:$0xff]
    %v221 = vld [vmem:[#allocation5 + $0x598] sm:$0xff]
    %v222 = vld [vmem:[#allocation5 + $0x5a0] sm:$0xff]
    %v223 = vld [vmem:[#allocation5 + $0x5a8] sm:$0xff]
    %v224 = vld [vmem:[#allocation5 + $0x5b0] sm:$0xff]
    %v225 = vld [vmem:[#allocation5 + $0x5b8] sm:$0xff]
    %v226 = vld [vmem:[#allocation5 + $0x5c0] sm:$0xff]
    %v227 = vld [vmem:[#allocation5 + $0x5c8] sm:$0xff]
    %v228 = vld [vmem:[#allocation5 + $0x5d0] sm:$0xff]
    %v229 = vld [vmem:[#allocation5 + $0x5d8] sm:$0xff]
    %v230 = vld [vmem:[#allocation5 + $0x5e0] sm:$0xff]
    %v231 = vld [vmem:[#allocation5 + $0x5e8] sm:$0xff]
    %v232 = vld [vmem:[#allocation5 + $0x5f0] sm:$0xff]
    %v233 = vld [vmem:[#allocation5 + $0x5f8] sm:$0xff]
    %v234 = vld [vmem:[#allocation5 + $0x600] sm:$0xff]
    %v235 = vld [vmem:[#allocation5 + $0x608] sm:$0xff]
    %v236 = vld [vmem:[#allocation5 + $0x610] sm:$0xff]
    %v237 = vld [vmem:[#allocation5 + $0x618] sm:$0xff]
    %v238 = vld [vmem:[#allocation5 + $0x620] sm:$0xff]
    %v239 = vld [vmem:[#allocation5 + $0x628] sm:$0xff]
    %v240 = vld [vmem:[#allocation5 + $0x630] sm:$0xff]
    %v241 = vld [vmem:[#allocation5 + $0x638] sm:$0xff]
    %v242 = vld [vmem:[#allocation5 + $0x640] sm:$0xff]
    %v243 = vld [vmem:[#allocation5 + $0x648] sm:$0xff]
    %v244 = vld [vmem:[#allocation5 + $0x650] sm:$0xff]
    %v245 = vld [vmem:[#allocation5 + $0x658] sm:$0xff]
    %v246 = vld [vmem:[#allocation5 + $0x660] sm:$0xff]
    %v247 = vld [vmem:[#allocation5 + $0x668] sm:$0xff]
    %v248 = vld [vmem:[#allocation5 + $0x670] sm:$0xff]
    %v249 = vld [vmem:[#allocation5 + $0x678] sm:$0xff]
    %v250 = vld [vmem:[#allocation5 + $0x680] sm:$0xff]
    %v251 = vld [vmem:[#allocation5 + $0x688] sm:$0xff]
    %v252 = vld [vmem:[#allocation5 + $0x690] sm:$0xff]
    %v253 = vld [vmem:[#allocation5 + $0x698] sm:$0xff]
    %v254 = vld [vmem:[#allocation5 + $0x6a0] sm:$0xff]
    %v255 = vld [vmem:[#allocation5 + $0x6a8] sm:$0xff]
    %v256 = vld [vmem:[#allocation5 + $0x6b0] sm:$0xff]
    %v257 = vld [vmem:[#allocation5 + $0x6b8] sm:$0xff]
    %v258 = vld [vmem:[#allocation5 + $0x6c0] sm:$0xff]
    %v259 = vld [vmem:[#allocation5 + $0x6c8] sm:$0xff]
    %v260 = vld [vmem:[#allocation5 + $0x6d0] sm:$0xff]
    %v261 = vld [vmem:[#allocation5 + $0x6d8] sm:$0xff]
    %v262 = vld [vmem:[#allocation5 + $0x6e0] sm:$0xff]
    %v263 = vld [vmem:[#allocation5 + $0x6e8] sm:$0xff]
    %v264 = vld [vmem:[#allocation5 + $0x6f0] sm:$0xff]
    %v265 = vld [vmem:[#allocation5 + $0x6f8] sm:$0xff]
    %v266 = vld [vmem:[#allocation5 + $0x700] sm:$0xff]
    %v267 = vld [vmem:[#allocation5 + $0x708] sm:$0xff]
    %v268 = vld [vmem:[#allocation5 + $0x710] sm:$0xff]
    %v269 = vld [vmem:[#allocation5 + $0x718] sm:$0xff]
    %v270 = vld [vmem:[#allocation5 + $0x720] sm:$0xff]
    %v271 = vld [vmem:[#allocation5 + $0x728] sm:$0xff]
    %v272 = vld [vmem:[#allocation5 + $0x730] sm:$0xff]
    %v273 = vld [vmem:[#allocation5 + $0x738] sm:$0xff]
    %v274 = vld [vmem:[#allocation5 + $0x740] sm:$0xff]
    %v275 = vld [vmem:[#allocation5 + $0x748] sm:$0xff]
    %v276 = vld [vmem:[#allocation5 + $0x750] sm:$0xff]
    %v277 = vld [vmem:[#allocation5 + $0x758] sm:$0xff]
    %v278 = vld [vmem:[#allocation5 + $0x760] sm:$0xff]
    %v279 = vld [vmem:[#allocation5 + $0x768] sm:$0xff]
    %v280 = vld [vmem:[#allocation5 + $0x770] sm:$0xff]
    %v281 = vld [vmem:[#allocation5 + $0x778] sm:$0xff]
    %v282 = vld [vmem:[#allocation5 + $0x780] sm:$0xff]
    %v283 = vld [vmem:[#allocation5 + $0x788] sm:$0xff]
    %v284 = vld [vmem:[#allocation5 + $0x790] sm:$0xff]
    %v285 = vld [vmem:[#allocation5 + $0x798] sm:$0xff]
    %v286 = vld [vmem:[#allocation5 + $0x7a0] sm:$0xff]
    %v287 = vld [vmem:[#allocation5 + $0x7a8] sm:$0xff]
    %v288 = vld [vmem:[#allocation5 + $0x7b0] sm:$0xff]
    %v289 = vld [vmem:[#allocation5 + $0x7b8] sm:$0xff]
    %v290 = vld [vmem:[#allocation5 + $0x7c0] sm:$0xff]
    %v291 = vld [vmem:[#allocation5 + $0x7c8] sm:$0xff]
    %v292 = vld [vmem:[#allocation5 + $0x7d0] sm:$0xff]
    %v293 = vld [vmem:[#allocation5 + $0x7d8] sm:$0xff]
    %v294 = vld [vmem:[#allocation5 + $0x7e0] sm:$0xff]
    %v295 = vld [vmem:[#allocation5 + $0x7e8] sm:$0xff]
    %v296 = vld [vmem:[#allocation5 + $0x7f0] sm:$0xff]
    %v297 = vld [vmem:[#allocation5 + $0x7f8] sm:$0xff]
    %v299 = vcombine.high %v41, %v41
    %301 = vmatprep.subr.mxu0 %v43
    %302 = vmatpush1.msra.mxu0 %v42
    %303 = vmatprep.subr.mxu0 %v51
    %304 = vmatpush1.msra.mxu0 %v50
    %305 = vmatprep.subr.mxu0 %v59
    %306 = vmatpush1.msra.mxu0 %v58
    %307 = vmatprep.subr.mxu0 %v67
    %308 = vmatpush1.msra.mxu0 %v66
    %309 = vmatprep.subr.mxu0 %v75
    %310 = vmatpush1.msra.mxu0 %v74
    %311 = vmatprep.subr.mxu0 %v83
    %312 = vmatpush1.msra.mxu0 %v82
    %313 = vmatprep.subr.mxu0 %v91
    %314 = vmatpush1.msra.mxu0 %v90
    %315 = vmatprep.subr.mxu0 %v99
    %316 = vmatpush1.msra.mxu0 %v98
    %317 = vmatprep.subr.mxu0 %v107
    %318 = vmatpush1.msra.mxu0 %v106
    %319 = vmatprep.subr.mxu0 %v115
    %320 = vmatpush1.msra.mxu0 %v114
    %321 = vmatprep.subr.mxu0 %v123
    %322 = vmatpush1.msra.mxu0 %v122
    %323 = vmatprep.subr.mxu0 %v131
    %324 = vmatpush1.msra.mxu0 %v130
    %325 = vmatprep.subr.mxu0 %v139
    %326 = vmatpush1.msra.mxu0 %v138
    %327 = vmatprep.subr.mxu0 %v147
    %328 = vmatpush1.msra.mxu0 %v146
    %329 = vmatprep.subr.mxu0 %v155
    %330 = vmatpush1.msra.mxu0 %v154
    %331 = vmatprep.subr.mxu0 %v163
    %332 = vmatpush1.msra.mxu0 %v162
    %333 = vmatprep.subr.mxu0 %v171
    %334 = vmatpush1.msra.mxu0 %v170
    %335 = vmatprep.subr.mxu0 %v179
    %336 = vmatpush1.msra.mxu0 %v178
    %337 = vmatprep.subr.mxu0 %v187
    %338 = vmatpush1.msra.mxu0 %v186
    %339 = vmatprep.subr.mxu0 %v195
    %340 = vmatpush1.msra.mxu0 %v194
    %341 = vmatprep.subr.mxu0 %v203
    %342 = vmatpush1.msra.mxu0 %v202
    %343 = vmatprep.subr.mxu0 %v211
    %344 = vmatpush1.msra.mxu0 %v210
    %345 = vmatprep.subr.mxu0 %v219
    %346 = vmatpush1.msra.mxu0 %v218
    %347 = vmatprep.subr.mxu0 %v227
    %348 = vmatpush1.msra.mxu0 %v226
    %349 = vmatprep.subr.mxu0 %v235
    %350 = vmatpush1.msra.mxu0 %v234
    %351 = vmatprep.subr.mxu0 %v243
    %352 = vmatpush1.msra.mxu0 %v242
    %353 = vmatprep.subr.mxu0 %v251
    %354 = vmatpush1.msra.mxu0 %v250
    %355 = vmatprep.subr.mxu0 %v259
    %356 = vmatpush1.msra.mxu0 %v258
    %357 = vmatprep.subr.mxu0 %v267
    %358 = vmatpush1.msra.mxu0 %v266
    %359 = vmatprep.subr.mxu0 %v275
    %360 = vmatpush1.msra.mxu0 %v274
    %361 = vmatprep.subr.mxu0 %v283
    %362 = vmatpush1.msra.mxu0 %v282
    %363 = vmatprep.subr.mxu0 %v291
    %364 = vmatpush1.msra.mxu0 %v290
    %365 = vmatprep.mubr.f32.mxu0 %v299
    %366 = vmatmul.mubr.f32.gmra.mrb[0].mxu0 %v41
    %v367 = vpop.f32.mrb[0].mxu0
    %v368 = vadd.f32 0.0, %v367
    %v369 = vpop.f32.mrb[0].mxu0
    %v370 = vadd.f32 0.0, %v369
    %371 = vdwg.mxu0
    %372 = vmatprep.subr.mxu0 %v45
    %373 = vmatpush1.msra.mxu0 %v44
    %374 = vmatprep.subr.mxu0 %v53
    %375 = vmatpush1.msra.mxu0 %v52
    %376 = vmatprep.subr.mxu0 %v61
    %377 = vmatpush1.msra.mxu0 %v60
    %378 = vmatprep.subr.mxu0 %v69
    %379 = vmatpush1.msra.mxu0 %v68
    %380 = vmatprep.subr.mxu0 %v77
    %381 = vmatpush1.msra.mxu0 %v76
    %382 = vmatprep.subr.mxu0 %v85
    %383 = vmatpush1.msra.mxu0 %v84
    %384 = vmatprep.subr.mxu0 %v93
    %385 = vmatpush1.msra.mxu0 %v92
    %386 = vmatprep.subr.mxu0 %v101
    %387 = vmatpush1.msra.mxu0 %v100
    %388 = vmatprep.subr.mxu0 %v109
    %389 = vmatpush1.msra.mxu0 %v108
    %390 = vmatprep.subr.mxu0 %v117
    %391 = vmatpush1.msra.mxu0 %v116
    %392 = vmatprep.subr.mxu0 %v125
    %393 = vmatpush1.msra.mxu0 %v124
    %394 = vmatprep.subr.mxu0 %v133
    %395 = vmatpush1.msra.mxu0 %v132
    %396 = vmatprep.subr.mxu0 %v141
    %397 = vmatpush1.msra.mxu0 %v140
    %398 = vmatprep.subr.mxu0 %v149
    %399 = vmatpush1.msra.mxu0 %v148
    %400 = vmatprep.subr.mxu0 %v157
    %401 = vmatpush1.msra.mxu0 %v156
    %402 = vmatprep.subr.mxu0 %v165
    %403 = vmatpush1.msra.mxu0 %v164
    %404 = vmatprep.subr.mxu0 %v173
    %405 = vmatpush1.msra.mxu0 %v172
    %406 = vmatprep.subr.mxu0 %v181
    %407 = vmatpush1.msra.mxu0 %v180
    %408 = vmatprep.subr.mxu0 %v189
    %409 = vmatpush1.msra.mxu0 %v188
    %410 = vmatprep.subr.mxu0 %v197
    %411 = vmatpush1.msra.mxu0 %v196
    %412 = vmatprep.subr.mxu0 %v205
    %413 = vmatpush1.msra.mxu0 %v204
    %414 = vmatprep.subr.mxu0 %v213
    %415 = vmatpush1.msra.mxu0 %v212
    %416 = vmatprep.subr.mxu0 %v221
    %417 = vmatpush1.msra.mxu0 %v220
    %418 = vmatprep.subr.mxu0 %v229
    %419 = vmatpush1.msra.mxu0 %v228
    %420 = vmatprep.subr.mxu0 %v237
    %421 = vmatpush1.msra.mxu0 %v236
    %422 = vmatprep.subr.mxu0 %v245
    %423 = vmatpush1.msra.mxu0 %v244
    %424 = vmatprep.subr.mxu0 %v253
    %425 = vmatpush1.msra.mxu0 %v252
    %426 = vmatprep.subr.mxu0 %v261
    %427 = vmatpush1.msra.mxu0 %v260
    %428 = vmatprep.subr.mxu0 %v269
    %429 = vmatpush1.msra.mxu0 %v268
    %430 = vmatprep.subr.mxu0 %v277
    %431 = vmatpush1.msra.mxu0 %v276
    %432 = vmatprep.subr.mxu0 %v285
    %433 = vmatpush1.msra.mxu0 %v284
    %434 = vmatprep.subr.mxu0 %v293
    %435 = vmatpush1.msra.mxu0 %v292
    %436 = vmatprep.mubr.f32.mxu0 %v299
    %437 = vmatmul.mubr.f32.gmra.mrb[0].mxu0 %v41
    %v438 = vpop.f32.mrb[0].mxu0
    %v439 = vadd.f32 0.0, %v438
    %v440 = vpop.f32.mrb[0].mxu0
    %v441 = vadd.f32 0.0, %v440
    %442 = vdwg.mxu0
    %443 = vmatprep.subr.mxu0 %v47
    %444 = vmatpush1.msra.mxu0 %v46
    %445 = vmatprep.subr.mxu0 %v55
    %446 = vmatpush1.msra.mxu0 %v54
    %447 = vmatprep.subr.mxu0 %v63
    %448 = vmatpush1.msra.mxu0 %v62
    %449 = vmatprep.subr.mxu0 %v71
    %450 = vmatpush1.msra.mxu0 %v70
    %451 = vmatprep.subr.mxu0 %v79
    %452 = vmatpush1.msra.mxu0 %v78
    %453 = vmatprep.subr.mxu0 %v87
    %454 = vmatpush1.msra.mxu0 %v86
    %455 = vmatprep.subr.mxu0 %v95
    %456 = vmatpush1.msra.mxu0 %v94
    %457 = vmatprep.subr.mxu0 %v103
    %458 = vmatpush1.msra.mxu0 %v102
    %459 = vmatprep.subr.mxu0 %v111
    %460 = vmatpush1.msra.mxu0 %v110
    %461 = vmatprep.subr.mxu0 %v119
    %462 = vmatpush1.msra.mxu0 %v118
    %463 = vmatprep.subr.mxu0 %v127
    %464 = vmatpush1.msra.mxu0 %v126
    %465 = vmatprep.subr.mxu0 %v135
    %466 = vmatpush1.msra.mxu0 %v134
    %467 = vmatprep.subr.mxu0 %v143
    %468 = vmatpush1.msra.mxu0 %v142
    %469 = vmatprep.subr.mxu0 %v151
    %470 = vmatpush1.msra.mxu0 %v150
    %471 = vmatprep.subr.mxu0 %v159
    %472 = vmatpush1.msra.mxu0 %v158
    %473 = vmatprep.subr.mxu0 %v167
    %474 = vmatpush1.msra.mxu0 %v166
    %475 = vmatprep.subr.mxu0 %v175
    %476 = vmatpush1.msra.mxu0 %v174
    %477 = vmatprep.subr.mxu0 %v183
    %478 = vmatpush1.msra.mxu0 %v182
    %479 = vmatprep.subr.mxu0 %v191
    %480 = vmatpush1.msra.mxu0 %v190
    %481 = vmatprep.subr.mxu0 %v199
    %482 = vmatpush1.msra.mxu0 %v198
    %483 = vmatprep.subr.mxu0 %v207
    %484 = vmatpush1.msra.mxu0 %v206
    %485 = vmatprep.subr.mxu0 %v215
    %486 = vmatpush1.msra.mxu0 %v214
    %487 = vmatprep.subr.mxu0 %v223
    %488 = vmatpush1.msra.mxu0 %v222
    %489 = vmatprep.subr.mxu0 %v231
    %490 = vmatpush1.msra.mxu0 %v230
    %491 = vmatprep.subr.mxu0 %v239
    %492 = vmatpush1.msra.mxu0 %v238
    %493 = vmatprep.subr.mxu0 %v247
    %494 = vmatpush1.msra.mxu0 %v246
    %495 = vmatprep.subr.mxu0 %v255
    %496 = vmatpush1.msra.mxu0 %v254
    %497 = vmatprep.subr.mxu0 %v263
    %498 = vmatpush1.msra.mxu0 %v262
    %499 = vmatprep.subr.mxu0 %v271
    %500 = vmatpush1.msra.mxu0 %v270
    %501 = vmatprep.subr.mxu0 %v279
    %502 = vmatpush1.msra.mxu0 %v278
    %503 = vmatprep.subr.mxu0 %v287
    %504 = vmatpush1.msra.mxu0 %v286
    %505 = vmatprep.subr.mxu0 %v295
    %506 = vmatpush1.msra.mxu0 %v294
    %507 = vmatprep.mubr.f32.mxu0 %v299
    %508 = vmatmul.mubr.f32.gmra.mrb[0].mxu0 %v41
    %v509 = vpop.f32.mrb[0].mxu0
    %v510 = vadd.f32 0.0, %v509
    %v511 = vpop.f32.mrb[0].mxu0
    %v512 = vadd.f32 0.0, %v511
    %513 = vdwg.mxu0
    %514 = vmatprep.subr.mxu0 %v49
    %515 = vmatpush1.msra.mxu0 %v48
    %516 = vmatprep.subr.mxu0 %v57
    %517 = vmatpush1.msra.mxu0 %v56
    %518 = vmatprep.subr.mxu0 %v65
    %519 = vmatpush1.msra.mxu0 %v64
    %520 = vmatprep.subr.mxu0 %v73
    %521 = vmatpush1.msra.mxu0 %v72
    %522 = vmatprep.subr.mxu0 %v81
    %523 = vmatpush1.msra.mxu0 %v80
    %524 = vmatprep.subr.mxu0 %v89
    %525 = vmatpush1.msra.mxu0 %v88
    %526 = vmatprep.subr.mxu0 %v97
    %527 = vmatpush1.msra.mxu0 %v96
    %528 = vmatprep.subr.mxu0 %v105
    %529 = vmatpush1.msra.mxu0 %v104
    %530 = vmatprep.subr.mxu0 %v113
    %531 = vmatpush1.msra.mxu0 %v112
    %532 = vmatprep.subr.mxu0 %v121
    %533 = vmatpush1.msra.mxu0 %v120
    %534 = vmatprep.subr.mxu0 %v129
    %535 = vmatpush1.msra.mxu0 %v128
    %536 = vmatprep.subr.mxu0 %v137
    %537 = vmatpush1.msra.mxu0 %v136
    %538 = vmatprep.subr.mxu0 %v145
    %539 = vmatpush1.msra.mxu0 %v144
    %540 = vmatprep.subr.mxu0 %v153
    %541 = vmatpush1.msra.mxu0 %v152
    %542 = vmatprep.subr.mxu0 %v161
    %543 = vmatpush1.msra.mxu0 %v160
    %544 = vmatprep.subr.mxu0 %v169
    %545 = vmatpush1.msra.mxu0 %v168
    %546 = vmatprep.subr.mxu0 %v177
    %547 = vmatpush1.msra.mxu0 %v176
    %548 = vmatprep.subr.mxu0 %v185
    %549 = vmatpush1.msra.mxu0 %v184
    %550 = vmatprep.subr.mxu0 %v193
    %551 = vmatpush1.msra.mxu0 %v192
    %552 = vmatprep.subr.mxu0 %v201
    %553 = vmatpush1.msra.mxu0 %v200
    %554 = vmatprep.subr.mxu0 %v209
    %555 = vmatpush1.msra.mxu0 %v208
    %556 = vmatprep.subr.mxu0 %v217
    %557 = vmatpush1.msra.mxu0 %v216
    %558 = vmatprep.subr.mxu0 %v225
    %559 = vmatpush1.msra.mxu0 %v224
    %560 = vmatprep.subr.mxu0 %v233
    %561 = vmatpush1.msra.mxu0 %v232
    %562 = vmatprep.subr.mxu0 %v241
    %563 = vmatpush1.msra.mxu0 %v240
    %564 = vmatprep.subr.mxu0 %v249
    %565 = vmatpush1.msra.mxu0 %v248
    %566 = vmatprep.subr.mxu0 %v257
    %567 = vmatpush1.msra.mxu0 %v256
    %568 = vmatprep.subr.mxu0 %v265
    %569 = vmatpush1.msra.mxu0 %v264
    %570 = vmatprep.subr.mxu0 %v273
    %571 = vmatpush1.msra.mxu0 %v272
    %572 = vmatprep.subr.mxu0 %v281
    %573 = vmatpush1.msra.mxu0 %v280
    %574 = vmatprep.subr.mxu0 %v289
    %575 = vmatpush1.msra.mxu0 %v288
    %576 = vmatprep.subr.mxu0 %v297
    %577 = vmatpush1.msra.mxu0 %v296
    %578 = vmatprep.mubr.f32.mxu0 %v299
    %579 = vmatmul.mubr.f32.gmra.mrb[0].mxu0 %v41
    %v580 = vpop.f32.mrb[0].mxu0
    %v581 = vadd.f32 0.0, %v580
    %v582 = vpop.f32.mrb[0].mxu0
    %v583 = vadd.f32 0.0, %v582
    %584 = vdwg.mxu0
    %v585 = vsub.f32 %v368, 1.0
    %v586 = vsub.f32 %v370, 1.0
    %v587 = vsub.f32 %v439, 1.0
    %v588 = vsub.f32 %v441, 1.0
    %v589 = vsub.f32 %v510, 1.0
    %v590 = vsub.f32 %v512, 1.0
    %v591 = vsub.f32 %v581, 1.0
    %v592 = vsub.f32 %v583, 1.0
    %v601 = vcombine.low %v585, %v586
    %v602 = vcombine.low %v587, %v588
    %v604 = vunpack.c.l.s4 1983009808
    %v605 = vunpack.c.0.s8 %v604
    %v606 = vlaneseq
    %v607 = vshrl.u32 %v606, 7
    %v608 = vsub.s32 %v605, %v607
    %v609 = vrot.slane %v601, %v608
    %v611 = vunpack.c.l.s4 1983009808
    %v612 = vunpack.c.0.s8 %v611
    %v613 = vlaneseq
    %v614 = vshrl.u32 %v613, 7
    %v615 = vsub.s32 %v612, %v614
    %v616 = vrot.slane %v602, %v615
    %v617 = vcombine.low %v609, %v616
    %v618 = vcombine.low %v589, %v590
    %v619 = vcombine.low %v591, %v592
    %v621 = vunpack.c.l.s4 1983009808
    %v622 = vunpack.c.0.s8 %v621
    %v623 = vlaneseq
    %v624 = vshrl.u32 %v623, 7
    %v625 = vsub.s32 %v622, %v624
    %v626 = vrot.slane %v618, %v625
    %v628 = vunpack.c.l.s4 1983009808
    %v629 = vunpack.c.0.s8 %v628
    %v630 = vlaneseq
    %v631 = vshrl.u32 %v630, 7
    %v632 = vsub.s32 %v629, %v631
    %v633 = vrot.slane %v619, %v632
    %v634 = vcombine.low %v626, %v633
    %637 = vst [vmem:[#allocation7] sm:$0xff] %v617
    %638 = vst [vmem:[#allocation7 + $0x8] sm:$0xff] %v634
    // Predicated region
    $region18: #{tpu_custom_call.1} parent=1 // pred_check
      _
    $region19: #{tpu_custom_call.1} parent=1 // pred_check_branch
      %640 = sbr.rel (0) target = $region21
    $region20: #{tpu_custom_call.1} parent=1 // pred_region
      %s642 = ssub.s32 256, 256
      %643 = vsyncadd [#allocation4], %s642
      %s645 = sshll.u32 [#allocation7], 4
      %s646 = int_to_ptr.vmem [resolvable:$true] %s645
      %648 = dma.vmem_to_hbm [thread:$0]  %s646, 256, %s2, [#allocation4]
    $region21: #{tpu_custom_call.1} parent=1 // pred_fallthru
      _
    // Predicated region
    $region22: #{tpu_custom_call.1} parent=1 // pred_check
      _
    $region23: #{tpu_custom_call.1} parent=1 // pred_check_branch
      %650 = sbr.rel (0) target = $region25
    $region24: #{tpu_custom_call.1} parent=1 // pred_region
      %651 = dma.done [#allocation4], 256
    $region25: #{tpu_custom_call.1} parent=1 // pred_fallthru
      _
    %652 = vsyncpa [#allocation3], 1
    %653 = vsyncpa [#allocation6], 1
    %654 = vsyncpa [#allocation4], 1

</llo_original>
